<compile_context>
chip_gen: v7x
topology: tpu7x:2x2x1
jax: 0.10.0
libtpu: 0.0.40
codegen_flags: <defaults>
</compile_context>

<pallas_src>
import functools

import jax
import jax.numpy as jnp
from jax import lax
from jax.experimental import pallas as pl
from jax.experimental.pallas import tpu as pltpu

CIN = 32
COUT = 72
EPS = 1e-5

# Rough per-output-column VMEM footprint of the single-step path (double
# buffered x/res/out blocks + f32 intermediates) used to pick the path.
_BYTES_PER_COL_SINGLE = 2048
_SINGLE_STEP_VMEM_BUDGET = 12 * 1024 * 1024   # conservative even for v5e
_VMEM_LIMIT_BYTES = 32 * 1024 * 1024          # explicit (v5e default is 16 MiB)


def _round_up(x, mult):
    return -(-x // mult) * mult


# --------------------------------------------------------------------------
# Fast path: whole problem in one grid step (production shape ~3.2 MB in VMEM)
# --------------------------------------------------------------------------
def _single_step_kernel(x_ref, w_ref, gamma_ref, beta_ref, res_ref, o_ref, *,
                        m_true):
    # x_ref: [CIN, M], w_ref: [COUT, CIN], gamma/beta: [COUT, 1]
    # res_ref / o_ref: [COUT, M]  (channel-major == native NCHW flattening)
    y = jnp.dot(w_ref[...], x_ref[...],
                preferred_element_type=jnp.float32)            # [COUT, M]
    inv_m = jnp.float32(1.0 / m_true)
    mean = jnp.sum(y, axis=1, keepdims=True) * inv_m           # [COUT, 1]
    yc = y - mean
    # Centered (two-pass) biased variance — training-mode BN semantics.
    var = jnp.sum(yc * yc, axis=1, keepdims=True) * inv_m
    scale = gamma_ref[...] * lax.rsqrt(var + jnp.float32(EPS))
    o_ref[...] = (yc * scale + beta_ref[...] + res_ref[...]).astype(o_ref.dtype)


def _single_step_call(x_cm, w_mat, gamma2, beta2, res_cm, m):
    cost = pl.CostEstimate(
        flops=2 * m * CIN * COUT,
        transcendentals=COUT,
        bytes_accessed=4 * (m * CIN + 2 * m * COUT + COUT * CIN + 2 * COUT),
    )
    kernel = functools.partial(_single_step_kernel, m_true=float(m))
    return pl.pallas_call(
        kernel,
        out_shape=jax.ShapeDtypeStruct((COUT, m), jnp.float32),
        grid_spec=pltpu.PrefetchScalarGridSpec(
            num_scalar_prefetch=0,
            grid=(1,),
            in_specs=[
                pl.BlockSpec((CIN, m), lambda i: (0, 0)),
                pl.BlockSpec((COUT, CIN), lambda i: (0, 0)),
                pl.BlockSpec((COUT, 1), lambda i: (0, 0)),
                pl.BlockSpec((COUT, 1), lambda i: (0, 0)),
                pl.BlockSpec((COUT, m), lambda i: (0, 0)),
            ],
            out_specs=pl.BlockSpec((COUT, m), lambda i: (0, 0)),
        ),
        compiler_params=pltpu.CompilerParams(
            dimension_semantics=("arbitrary",),
            vmem_limit_bytes=_VMEM_LIMIT_BYTES),
        cost_estimate=cost,
    )(x_cm, w_mat, gamma2, beta2, res_cm)


# --------------------------------------------------------------------------
# Fallback: tiled two-phase path for very large M (stats pass + apply pass)
# --------------------------------------------------------------------------
def _tiled_kernel(x_ref, w_ref, gamma_ref, beta_ref, res_ref, o_ref,
                  sum_ref, sumsq_ref, scale_ref, shift_ref, *, m_true, tm):
    # sum/sumsq scratch are (COUT, 128): per-lane partial sums accumulated with
    # VPU adds; the XLU lane reduction happens once in the finalize step.
    phase = pl.program_id(0)
    i = pl.program_id(1)
    n_i = pl.num_programs(1)

    @pl.when(jnp.logical_and(phase == 0, i == 0))
    def _init():
        sum_ref[...] = jnp.zeros_like(sum_ref)
        sumsq_ref[...] = jnp.zeros_like(sumsq_ref)

    @pl.when(phase == 0)
    def _stats():
        y = jnp.dot(w_ref[...], x_ref[...], preferred_element_type=jnp.float32)
        s = sum_ref[...]
        ss = sumsq_ref[...]
        for k in range(tm // 128):          # static unroll; lane-aligned slices
            blk = y[:, k * 128:(k + 1) * 128]
            s = s + blk
            ss = ss + blk * blk
        sum_ref[...] = s
        sumsq_ref[...] = ss

    @pl.when(jnp.logical_and(phase == 0, i == n_i - 1))
    def _finalize():
        # Biased (training-mode) variance via E[y^2] - mean^2; padded columns
        # of x are zero so they do not perturb the sums (true M is the count).
        inv_m = jnp.float32(1.0 / m_true)
        mean = jnp.sum(sum_ref[...], axis=1, keepdims=True) * inv_m
        var = jnp.sum(sumsq_ref[...], axis=1, keepdims=True) * inv_m - mean * mean
        inv_std = lax.rsqrt(var + jnp.float32(EPS))
        scale = gamma_ref[...] * inv_std
        scale_ref[...] = scale
        shift_ref[...] = beta_ref[...] - mean * scale

    @pl.when(phase == 1)
    def _apply():
        y = jnp.dot(w_ref[...], x_ref[...], preferred_element_type=jnp.float32)
        o_ref[...] = (y * scale_ref[...] + shift_ref[...]
                      + res_ref[...]).astype(o_ref.dtype)


def _choose_tile_m(m, target):
    """Lane tile (multiple of 128) <= target, preferring a divisor of
    round_up(m, 128) so we don't over-pad; otherwise accept padding."""
    m128 = _round_up(m, 128)
    target = max(128, (target // 128) * 128)
    cap = min(target, m128)
    tm = cap
    while tm >= 1024 and m128 % tm != 0:
        tm -= 128
    if m128 % tm != 0:
        tm = cap                              # accept padding (< tm columns)
    return tm, _round_up(m, tm)


def _tiled_call(x_cm, w_mat, gamma2, beta2, res_cm, m, tile_m):
    tm, m_pad = _choose_tile_m(m, tile_m)
    nt = m_pad // tm
    if m_pad != m:
        x_cm = jnp.pad(x_cm, ((0, 0), (0, m_pad - m)))
        res_cm = jnp.pad(res_cm, ((0, 0), (0, m_pad - m)))

    cost = pl.CostEstimate(
        flops=2 * 2 * m_pad * CIN * COUT,      # matmul done in both phases
        transcendentals=COUT,
        bytes_accessed=4 * (2 * m_pad * CIN + 2 * m_pad * COUT + COUT * CIN),
    )
    kernel = functools.partial(_tiled_kernel, m_true=float(m), tm=tm)

    out_cm = pl.pallas_call(
        kernel,
        out_shape=jax.ShapeDtypeStruct((COUT, m_pad), jnp.float32),
        grid_spec=pltpu.PrefetchScalarGridSpec(
            num_scalar_prefetch=0,
            grid=(2, nt),                       # (phase, m-tile)
            in_specs=[
                # x: streamed every tile in both phases (recompute fallback).
                pl.BlockSpec((CIN, tm), lambda p, i: (0, i)),
                # Weight / gamma / beta: constant block index -> fetched once.
                pl.BlockSpec((COUT, CIN), lambda p, i: (0, 0)),
                pl.BlockSpec((COUT, 1), lambda p, i: (0, 0)),
                pl.BlockSpec((COUT, 1), lambda p, i: (0, 0)),
                # Residual: only consumed in phase 1; pin the block index to 0
                # during phase 0 so it is read from HBM only once per tile.
                pl.BlockSpec((COUT, tm), lambda p, i: (0, i * p)),
            ],
            out_specs=pl.BlockSpec((COUT, tm), lambda p, i: (0, i * p)),
            scratch_shapes=[
                pltpu.VMEM((COUT, 128), jnp.float32),   # per-lane sum(y)
                pltpu.VMEM((COUT, 128), jnp.float32),   # per-lane sum(y*y)
                pltpu.VMEM((COUT, 1), jnp.float32),     # scale = gamma*inv_std
                pltpu.VMEM((COUT, 1), jnp.float32),     # shift = beta-mean*scale
            ],
        ),
        compiler_params=pltpu.CompilerParams(
            dimension_semantics=("arbitrary", "arbitrary"),
            vmem_limit_bytes=_VMEM_LIMIT_BYTES),
        cost_estimate=cost,
    )(x_cm, w_mat, gamma2, beta2, res_cm)
    return out_cm[:, :m]


# --------------------------------------------------------------------------
# Wrapper
# --------------------------------------------------------------------------
@functools.partial(jax.jit, static_argnames=("tile_m", "force_tiled"))
def conv_bn_add(x3, weight, gamma, beta, x19, tile_m=4096, force_tiled=False):
    """x3: NCHW [N, 32, H, W]; x19: NCHW [N, 72, Ho, Wo]; weight: [72, 32, 1, 1]."""
    n, cin, h, w = x3.shape
    assert cin == CIN
    # Stride-2 sampling for a 1x1 kernel: take every other pixel.  Kept as a
    # wrapper XLA pass (small operand); the 72-channel tensors are never
    # re-laid-out or padded on the fast path.
    xs = x3[:, :, ::2, ::2]                                    # [N, CIN, Ho, Wo]
    ho, wo = xs.shape[2], xs.shape[3]
    m_img = ho * wo
    m = n * m_img

    # Channel-major flattening (free reshapes for N == 1).
    x_cm = jnp.transpose(xs.reshape(n, CIN, m_img), (1, 0, 2)).reshape(CIN, m)
    x_cm = x_cm.astype(jnp.float32)
    res_cm = jnp.transpose(x19.reshape(n, COUT, m_img), (1, 0, 2)).reshape(COUT, m)
    res_cm = res_cm.astype(jnp.float32)
    w_mat = weight.reshape(COUT, CIN).astype(jnp.float32)
    gamma2 = gamma.reshape(COUT, 1).astype(jnp.float32)
    beta2 = beta.reshape(COUT, 1).astype(jnp.float32)

    single = (not force_tiled) and (m * _BYTES_PER_COL_SINGLE
                                    <= _SINGLE_STEP_VMEM_BUDGET)
    if single:
        out_cm = _single_step_call(x_cm, w_mat, gamma2, beta2, res_cm, m)
    else:
        out_cm = _tiled_call(x_cm, w_mat, gamma2, beta2, res_cm, m, tile_m)

    out = out_cm.reshape(COUT, n, ho, wo)
    return jnp.transpose(out, (1, 0, 2, 3))                    # free for N == 1


if __name__ == "__main__":
    key = jax.random.PRNGKey(0)
    k1, k2, k3 = jax.random.split(key, 3)

    # Small shapes consistent with the module: N=1, Cin=32 -> Cout=72, stride 2.
    N, H, W = 1, 32, 32
    HO, WO = H // 2, W // 2

    x3 = jax.random.normal(k1, (N, CIN, H, W), dtype=jnp.float32)
    x19 = jax.random.normal(k2, (N, COUT, HO, WO), dtype=jnp.float32)
    weight = jax.random.normal(k3, (COUT, CIN, 1, 1), dtype=jnp.float32) * 0.1
    gamma = jnp.ones((COUT,), dtype=jnp.float32) * 1.5
    beta = jnp.full((COUT,), 0.25, dtype=jnp.float32)

    # Pure-JAX reference (training-mode BN: biased batch variance, eps=1e-5).
    xs = x3[:, :, ::2, ::2]
    y_ref = jnp.einsum("nchw,oc->nohw", xs, weight.reshape(COUT, CIN))
    mean = jnp.mean(y_ref, axis=(0, 2, 3), keepdims=True)
    var = jnp.mean((y_ref - mean) ** 2, axis=(0, 2, 3), keepdims=True)
    ref = (y_ref - mean) * jax.lax.rsqrt(var + EPS)
    ref = ref * gamma.reshape(1, COUT, 1, 1) + beta.reshape(1, COUT, 1, 1) + x19

    # Fast path: single grid step (the production 1x32x112x112 input takes this
    # path too: m = 3136 -> ~4 MB working set, well under every VMEM budget).
    out = conv_bn_add(x3, weight, gamma, beta, x19)
    jax.block_until_ready(out)
    assert out.shape == (N, COUT, HO, WO)
    assert jnp.allclose(out, ref, atol=1e-3, rtol=1e-3), (
        float(jnp.max(jnp.abs(out - ref))))

    # Large-M fallback: force the tiled two-phase path with a tiny tile so the
    # multi-tile stats/apply pipeline is exercised.
    out_tiled = conv_bn_add(x3, weight, gamma, beta, x19,
                            tile_m=128, force_tiled=True)
    jax.block_until_ready(out_tiled)
    assert jnp.allclose(out_tiled, ref, atol=1e-3, rtol=1e-3), (
        float(jnp.max(jnp.abs(out_tiled - ref))))

    print("KERNEL_OK")
</pallas_src>

<mosaic_0001>
module attributes {stable_mosaic.version = 11 : i64} {
  func.func @_single_step_kernel(%arg0: i32, %arg1: memref<32x256xf32, #tpu.memory_space<vmem>>, %arg2: memref<72x32xf32, #tpu.memory_space<vmem>>, %arg3: memref<72x1xf32, #tpu.memory_space<vmem>>, %arg4: memref<72x1xf32, #tpu.memory_space<vmem>>, %arg5: memref<72x256xf32, #tpu.memory_space<vmem>>, %arg6: memref<72x256xf32, #tpu.memory_space<vmem>>) attributes {dimension_semantics = [#tpu.dimension_semantics<arbitrary>], iteration_bounds = array<i64: 1>, scalar_prefetch = 0 : i64, scratch_operands = 0 : i64, tpu.core_type = #tpu.core_type<tc>, window_params = [{pipeline_mode = #tpu.pipeline_mode<synchronous>, transform_indices = @transform_0, window_bounds = array<i64: 32, 256>}, {pipeline_mode = #tpu.pipeline_mode<synchronous>, transform_indices = @transform_1, window_bounds = array<i64: 72, 32>}, {pipeline_mode = #tpu.pipeline_mode<synchronous>, transform_indices = @transform_2, window_bounds = array<i64: 72, 1>}, {pipeline_mode = #tpu.pipeline_mode<synchronous>, transform_indices = @transform_3, window_bounds = array<i64: 72, 1>}, {pipeline_mode = #tpu.pipeline_mode<synchronous>, transform_indices = @transform_4, window_bounds = array<i64: 72, 256>}, {pipeline_mode = #tpu.pipeline_mode<synchronous>, transform_indices = @transform_5, window_bounds = array<i64: 72, 256>}]} {
    %c0 = arith.constant 0 : index
    %c0_0 = arith.constant 0 : index
    %0 = vector.load %arg2[%c0, %c0_0] : memref<72x32xf32, #tpu.memory_space<vmem>>, vector<72x32xf32>
    %c0_1 = arith.constant 0 : index
    %c0_2 = arith.constant 0 : index
    %1 = vector.load %arg1[%c0_1, %c0_2] : memref<32x256xf32, #tpu.memory_space<vmem>>, vector<32x256xf32>
    %cst = arith.constant dense<0.000000e+00> : vector<72x256xf32>
    %2 = tpu.matmul %0, %1, %cst {dimension_numbers = #tpu.dot_dimension_numbers<[1], [0], [0], [1], [0, 0, 1, 1], [], []>} : vector<72x32xf32>, vector<32x256xf32>, vector<72x256xf32> -> vector<72x256xf32>
    %cst_3 = arith.constant dense<0.000000e+00> : vector<72xf32>
    %3 = vector.multi_reduction <add>, %2, %cst_3 [1] : vector<72x256xf32> to vector<72xf32>
    %4 = vector.shape_cast %3 : vector<72xf32> to vector<72x1xf32>
    %cst_4 = arith.constant 3.906250e-03 : f32
    %5 = vector.broadcast %cst_4 : f32 to vector<72x1xf32>
    %6 = arith.mulf %4, %5 : vector<72x1xf32>
    %7 = vector.broadcast %6 : vector<72x1xf32> to vector<72x256xf32>
    %8 = arith.subf %2, %7 : vector<72x256xf32>
    %9 = arith.mulf %8, %8 : vector<72x256xf32>
    %cst_5 = arith.constant dense<0.000000e+00> : vector<72xf32>
    %10 = vector.multi_reduction <add>, %9, %cst_5 [1] : vector<72x256xf32> to vector<72xf32>
    %11 = vector.shape_cast %10 : vector<72xf32> to vector<72x1xf32>
    %cst_6 = arith.constant 3.906250e-03 : f32
    %12 = vector.broadcast %cst_6 : f32 to vector<72x1xf32>
    %13 = arith.mulf %11, %12 : vector<72x1xf32>
    %c0_7 = arith.constant 0 : index
    %c0_8 = arith.constant 0 : index
    %14 = vector.load %arg3[%c0_7, %c0_8] : memref<72x1xf32, #tpu.memory_space<vmem>>, vector<72x1xf32>
    %cst_9 = arith.constant 9.99999974E-6 : f32
    %15 = vector.broadcast %cst_9 : f32 to vector<72x1xf32>
    %16 = arith.addf %13, %15 : vector<72x1xf32>
    %17 = math.rsqrt %16 : vector<72x1xf32>
    %18 = arith.mulf %14, %17 : vector<72x1xf32>
    %19 = vector.broadcast %18 : vector<72x1xf32> to vector<72x256xf32>
    %20 = arith.mulf %8, %19 : vector<72x256xf32>
    %c0_10 = arith.constant 0 : index
    %c0_11 = arith.constant 0 : index
    %21 = vector.load %arg4[%c0_10, %c0_11] : memref<72x1xf32, #tpu.memory_space<vmem>>, vector<72x1xf32>
    %22 = vector.broadcast %21 : vector<72x1xf32> to vector<72x256xf32>
    %23 = arith.addf %20, %22 : vector<72x256xf32>
    %c0_12 = arith.constant 0 : index
    %c0_13 = arith.constant 0 : index
    %24 = vector.load %arg5[%c0_12, %c0_13] : memref<72x256xf32, #tpu.memory_space<vmem>>, vector<72x256xf32>
    %25 = arith.addf %23, %24 : vector<72x256xf32>
    %c0_14 = arith.constant 0 : index
    %c0_15 = arith.constant 0 : index
    %26 = vector.load %arg6[%c0_14, %c0_15] : memref<72x256xf32, #tpu.memory_space<vmem>>, vector<72x256xf32>
    tpu.vector_store %arg6[%c0_14, %c0_15], %25 {strides = array<i32>} : memref<72x256xf32, #tpu.memory_space<vmem>>, vector<72x256xf32>,
    return
  }
  func.func @transform_0(%arg0: i32) -> (i32, i32) {
    %c0_i32 = arith.constant 0 : i32
    %c0_i32_0 = arith.constant 0 : i32
    %c0_i32_1 = arith.constant 0 : i32
    return %c0_i32, %c0_i32_0 : i32, i32
  }
  func.func @transform_1(%arg0: i32) -> (i32, i32) {
    %c0_i32 = arith.constant 0 : i32
    %c0_i32_0 = arith.constant 0 : i32
    %c0_i32_1 = arith.constant 0 : i32
    return %c0_i32, %c0_i32_0 : i32, i32
  }
  func.func @transform_2(%arg0: i32) -> (i32, i32) {
    %c0_i32 = arith.constant 0 : i32
    %c0_i32_0 = arith.constant 0 : i32
    %c0_i32_1 = arith.constant 0 : i32
    return %c0_i32, %c0_i32_0 : i32, i32
  }
  func.func @transform_3(%arg0: i32) -> (i32, i32) {
    %c0_i32 = arith.constant 0 : i32
    %c0_i32_0 = arith.constant 0 : i32
    %c0_i32_1 = arith.constant 0 : i32
    return %c0_i32, %c0_i32_0 : i32, i32
  }
  func.func @transform_4(%arg0: i32) -> (i32, i32) {
    %c0_i32 = arith.constant 0 : i32
    %c0_i32_0 = arith.constant 0 : i32
    %c0_i32_1 = arith.constant 0 : i32
    return %c0_i32, %c0_i32_0 : i32, i32
  }
  func.func @transform_5(%arg0: i32) -> (i32, i32) {
    %c0_i32 = arith.constant 0 : i32
    %c0_i32_0 = arith.constant 0 : i32
    %c0_i32_1 = arith.constant 0 : i32
    return %c0_i32, %c0_i32_0 : i32, i32
  }
}

</mosaic_0001>

<llo_original>
// kernel: conv_bn_add.1
$region0: #{conv_bn_add.1}
  #allocation0 [shape = 'u32[]', space=smem, size = 0x4, offset = 0x4, fixed_abs, tag = 'smem constant byte address 0x4 - core index']
  #allocation1 [shape = 'u32[144,128]{1,0:T(1,128)}', space=vmem, size = 0x12000, scoped, tag = 'internal scratch']
  %s0 = inlined_call_operand.vmem [shape: f32[32,256], index: 0, kind: input, shape index: {}]
  %s1 = inlined_call_operand.vmem [shape: f32[72,32], index: 1, kind: input, shape index: {}]
  %s2 = inlined_call_operand.vmem [shape: f32[72,1], index: 2, kind: input, shape index: {}]
  %s3 = inlined_call_operand.vmem [shape: f32[72,1], index: 3, kind: input, shape index: {}]
  %s4 = inlined_call_operand.vmem [shape: f32[72,256], index: 4, kind: input, shape index: {}]
  %s5 = inlined_call_operand.vmem [shape: f32[72,256], index: 5, kind: output, shape index: {}]
  %s6 = sld [smem:[#allocation0]]
  $region30: #{conv_bn_add.1} parent=0
    _
  %s8 = ssub.s32 1, %s6
  %s9 = scalar_select 0, %s8, %s6
  // Predicated region
  $region2: #{conv_bn_add.1} parent=0 // pred_check
    _
  $region3: #{conv_bn_add.1} parent=0 // pred_check_branch
    %11 = sbr.rel (0) target = $region5
  $region4: #{conv_bn_add.1} parent=0 // pred_region
    _
  $region5: #{conv_bn_add.1} parent=0 // pred_fallthru
    _
  // Predicated region
  $region6: #{conv_bn_add.1} parent=0 // pred_check
    _
  $region7: #{conv_bn_add.1} parent=0 // pred_check_branch
    %13 = sbr.rel (0) target = $region9
  $region8: #{conv_bn_add.1} parent=0 // pred_region
    _
  $region9: #{conv_bn_add.1} parent=0 // pred_fallthru
    _
  // Predicated region
  $region10: #{conv_bn_add.1} parent=0 // pred_check
    _
  $region11: #{conv_bn_add.1} parent=0 // pred_check_branch
    %15 = sbr.rel (0) target = $region13
  $region12: #{conv_bn_add.1} parent=0 // pred_region
    _
  $region13: #{conv_bn_add.1} parent=0 // pred_fallthru
    _
  // Predicated region
  $region14: #{conv_bn_add.1} parent=0 // pred_check
    _
  $region15: #{conv_bn_add.1} parent=0 // pred_check_branch
    %17 = sbr.rel (0) target = $region17
  $region16: #{conv_bn_add.1} parent=0 // pred_region
    _
  $region17: #{conv_bn_add.1} parent=0 // pred_fallthru
    _
  // Predicated region
  $region18: #{conv_bn_add.1} parent=0 // pred_check
    _
  $region19: #{conv_bn_add.1} parent=0 // pred_check_branch
    %19 = sbr.rel (0) target = $region21
  $region20: #{conv_bn_add.1} parent=0 // pred_region
    _
  $region21: #{conv_bn_add.1} parent=0 // pred_fallthru
    _
  %v20 = vld [vmem:[%s1] sm:$0xff]
  %v21 = vld [vmem:[%s1 + $0x8] sm:$0xff]
  %v22 = vld [vmem:[%s1 + $0x10] sm:$0xff]
  %v23 = vld [vmem:[%s1 + $0x18] sm:$0xff]
  %v24 = vld [vmem:[%s1 + $0x20] sm:$0xff]
  %v25 = vld [vmem:[%s1 + $0x28] sm:$0xff]
  %v26 = vld [vmem:[%s1 + $0x30] sm:$0xff]
  %v27 = vld [vmem:[%s1 + $0x38] sm:$0xff]
  %v28 = vld [vmem:[%s1 + $0x40] sm:$0xff]
  %v29 = vld [vmem:[%s0] sm:$0xff]
  %v30 = vld [vmem:[%s0 + $0x8] sm:$0xff]
  %v31 = vld [vmem:[%s0 + $0x10] sm:$0xff]
  %v32 = vld [vmem:[%s0 + $0x18] sm:$0xff]
  %v33 = vld [vmem:[%s0 + $0x20] sm:$0xff]
  %v34 = vld [vmem:[%s0 + $0x28] sm:$0xff]
  %v35 = vld [vmem:[%s0 + $0x30] sm:$0xff]
  %v36 = vld [vmem:[%s0 + $0x38] sm:$0xff]
  %vm37 = vcmask 261120
  %v39 = vsel %vm37, %v20, 0
  %v42 = vsel %vm37, %v21, 0
  %v45 = vsel %vm37, %v22, 0
  %v48 = vsel %vm37, %v23, 0
  %v51 = vsel %vm37, %v24, 0
  %v54 = vsel %vm37, %v25, 0
  %v57 = vsel %vm37, %v26, 0
  %v60 = vsel %vm37, %v27, 0
  %v63 = vsel %vm37, %v28, 0
  %65 = vmatprep.subr.mxu0 %v30
  %66 = vmatpush1.msra.mxu0 %v29
  %67 = vmatprep.subr.mxu0 %v32
  %68 = vmatpush1.msra.mxu0 %v31
  %69 = vmatprep.subr.mxu0 %v34
  %70 = vmatpush1.msra.mxu0 %v33
  %71 = vmatprep.subr.mxu0 %v36
  %72 = vmatpush1.msra.mxu0 %v35
  %73 = vmatprep.subr.mxu0 0.0
  %74 = vmatpush1.msra.mxu0 0.0
  %75 = vmatprep.subr.mxu0 0.0
  %76 = vmatpush1.msra.mxu0 0.0
  %77 = vmatprep.subr.mxu0 0.0
  %78 = vmatpush1.msra.mxu0 0.0
  %79 = vmatprep.subr.mxu0 0.0
  %80 = vmatpush1.msra.mxu0 0.0
  %81 = vmatprep.subr.mxu0 0.0
  %82 = vmatpush1.msra.mxu0 0.0
  %83 = vmatprep.subr.mxu0 0.0
  %84 = vmatpush1.msra.mxu0 0.0
  %85 = vmatprep.subr.mxu0 0.0
  %86 = vmatpush1.msra.mxu0 0.0
  %87 = vmatprep.subr.mxu0 0.0
  %88 = vmatpush1.msra.mxu0 0.0
  %89 = vmatprep.subr.mxu0 0.0
  %90 = vmatpush1.msra.mxu0 0.0
  %91 = vmatprep.subr.mxu0 0.0
  %92 = vmatpush1.msra.mxu0 0.0
  %93 = vmatprep.subr.mxu0 0.0
  %94 = vmatpush1.msra.mxu0 0.0
  %95 = vmatprep.subr.mxu0 0.0
  %96 = vmatpush1.msra.mxu0 0.0
  %97 = vmatprep.subr.mxu0 0.0
  %98 = vmatpush1.msra.mxu0 0.0
  %99 = vmatprep.subr.mxu0 0.0
  %100 = vmatpush1.msra.mxu0 0.0
  %101 = vmatprep.subr.mxu0 0.0
  %102 = vmatpush1.msra.mxu0 0.0
  %103 = vmatprep.subr.mxu0 0.0
  %104 = vmatpush1.msra.mxu0 0.0
  %105 = vmatprep.subr.mxu0 0.0
  %106 = vmatpush1.msra.mxu0 0.0
  %107 = vmatprep.subr.mxu0 0.0
  %108 = vmatpush1.msra.mxu0 0.0
  %109 = vmatprep.subr.mxu0 0.0
  %110 = vmatpush1.msra.mxu0 0.0
  %111 = vmatprep.subr.mxu0 0.0
  %112 = vmatpush1.msra.mxu0 0.0
  %113 = vmatprep.subr.mxu0 0.0
  %114 = vmatpush1.msra.mxu0 0.0
  %115 = vmatprep.subr.mxu0 0.0
  %116 = vmatpush1.msra.mxu0 0.0
  %117 = vmatprep.subr.mxu0 0.0
  %118 = vmatpush1.msra.mxu0 0.0
  %119 = vmatprep.subr.mxu0 0.0
  %120 = vmatpush1.msra.mxu0 0.0
  %121 = vmatprep.subr.mxu0 0.0
  %122 = vmatpush1.msra.mxu0 0.0
  %123 = vmatprep.subr.mxu0 0.0
  %124 = vmatpush1.msra.mxu0 0.0
  %125 = vmatprep.subr.mxu0 0.0
  %126 = vmatpush1.msra.mxu0 0.0
  %127 = vmatprep.subr.mxu0 0.0
  %128 = vmatpush1.msra.mxu0 0.0
  %129 = vmatprep.mubr.f32.mxu0 0.0
  %130 = vmatmul.mubr.f32.gmra.mrb[0].mxu0 %v39
  %v131 = vpop.f32.mrb[0].mxu0
  %v132 = vadd.f32 0.0, %v131
  %v133 = vpop.f32.mrb[0].mxu0
  %v134 = vadd.f32 0.0, %v133
  %135 = vmatprep.mubr.f32.mxu0 0.0
  %136 = vmatmul.mubr.f32.gmra.mrb[0].mxu0 %v42
  %v137 = vpop.f32.mrb[0].mxu0
  %v138 = vadd.f32 0.0, %v137
  %v139 = vpop.f32.mrb[0].mxu0
  %v140 = vadd.f32 0.0, %v139
  %141 = vmatprep.mubr.f32.mxu0 0.0
  %142 = vmatmul.mubr.f32.gmra.mrb[0].mxu0 %v45
  %v143 = vpop.f32.mrb[0].mxu0
  %v144 = vadd.f32 0.0, %v143
  %v145 = vpop.f32.mrb[0].mxu0
  %v146 = vadd.f32 0.0, %v145
  %147 = vmatprep.mubr.f32.mxu0 0.0
  %148 = vmatmul.mubr.f32.gmra.mrb[0].mxu0 %v48
  %v149 = vpop.f32.mrb[0].mxu0
  %v150 = vadd.f32 0.0, %v149
  %v151 = vpop.f32.mrb[0].mxu0
  %v152 = vadd.f32 0.0, %v151
  %153 = vmatprep.mubr.f32.mxu0 0.0
  %154 = vmatmul.mubr.f32.gmra.mrb[0].mxu0 %v51
  %v155 = vpop.f32.mrb[0].mxu0
  %v156 = vadd.f32 0.0, %v155
  %v157 = vpop.f32.mrb[0].mxu0
  %v158 = vadd.f32 0.0, %v157
  %159 = vmatprep.mubr.f32.mxu0 0.0
  %160 = vmatmul.mubr.f32.gmra.mrb[0].mxu0 %v54
  %v161 = vpop.f32.mrb[0].mxu0
  %v162 = vadd.f32 0.0, %v161
  %v163 = vpop.f32.mrb[0].mxu0
  %v164 = vadd.f32 0.0, %v163
  %165 = vmatprep.mubr.f32.mxu0 0.0
  %166 = vmatmul.mubr.f32.gmra.mrb[0].mxu0 %v57
  %v167 = vpop.f32.mrb[0].mxu0
  %v168 = vadd.f32 0.0, %v167
  %v169 = vpop.f32.mrb[0].mxu0
  %v170 = vadd.f32 0.0, %v169
  %171 = vmatprep.mubr.f32.mxu0 0.0
  %172 = vmatmul.mubr.f32.gmra.mrb[0].mxu0 %v60
  %v173 = vpop.f32.mrb[0].mxu0
  %v174 = vadd.f32 0.0, %v173
  %v175 = vpop.f32.mrb[0].mxu0
  %v176 = vadd.f32 0.0, %v175
  %177 = vmatprep.mubr.f32.mxu0 0.0
  %178 = vmatmul.mubr.f32.gmra.mrb[0].mxu0 %v63
  %v179 = vpop.f32.mrb[0].mxu0
  %v180 = vadd.f32 0.0, %v179
  %v181 = vpop.f32.mrb[0].mxu0
  %v182 = vadd.f32 0.0, %v181
  %183 = vdwg.mxu0
  %v184 = vadd.f32 %v132, %v134
  %185 = vadd.xlane.f32.xlu0 %v184
  %v186 = vpop.xlane.xlu0 %185
  %v187 = vadd.f32 %v138, %v140
  %188 = vadd.xlane.f32.xlu0 %v187
  %v189 = vpop.xlane.xlu0 %188
  %v190 = vadd.f32 %v144, %v146
  %191 = vadd.xlane.f32.xlu0 %v190
  %v192 = vpop.xlane.xlu0 %191
  %v193 = vadd.f32 %v150, %v152
  %194 = vadd.xlane.f32.xlu0 %v193
  %v195 = vpop.xlane.xlu0 %194
  %v196 = vadd.f32 %v156, %v158
  %197 = vadd.xlane.f32.xlu0 %v196
  %v198 = vpop.xlane.xlu0 %197
  %v199 = vadd.f32 %v162, %v164
  %200 = vadd.xlane.f32.xlu0 %v199
  %v201 = vpop.xlane.xlu0 %200
  %v202 = vadd.f32 %v168, %v170
  %203 = vadd.xlane.f32.xlu0 %v202
  %v204 = vpop.xlane.xlu0 %203
  %v205 = vadd.f32 %v174, %v176
  %206 = vadd.xlane.f32.xlu0 %v205
  %v207 = vpop.xlane.xlu0 %206
  %v208 = vadd.f32 %v180, %v182
  %209 = vadd.xlane.f32.xlu0 %v208
  %v210 = vpop.xlane.xlu0 %209
  %v211 = vmul.f32 %v186, 0.00390625
  %v212 = vmul.f32 %v189, 0.00390625
  %v213 = vmul.f32 %v192, 0.00390625
  %v214 = vmul.f32 %v195, 0.00390625
  %v215 = vmul.f32 %v198, 0.00390625
  %v216 = vmul.f32 %v201, 0.00390625
  %v217 = vmul.f32 %v204, 0.00390625
  %v218 = vmul.f32 %v207, 0.00390625
  %v219 = vmul.f32 %v210, 0.00390625
  %v220 = vsub.f32 %v132, %v211
  %v221 = vsub.f32 %v134, %v211
  %v222 = vsub.f32 %v138, %v212
  %v223 = vsub.f32 %v140, %v212
  %v224 = vsub.f32 %v144, %v213
  %v225 = vsub.f32 %v146, %v213
  %v226 = vsub.f32 %v150, %v214
  %v227 = vsub.f32 %v152, %v214
  %v228 = vsub.f32 %v156, %v215
  %v229 = vsub.f32 %v158, %v215
  %v230 = vsub.f32 %v162, %v216
  %v231 = vsub.f32 %v164, %v216
  %v232 = vsub.f32 %v168, %v217
  %v233 = vsub.f32 %v170, %v217
  %v234 = vsub.f32 %v174, %v218
  %v235 = vsub.f32 %v176, %v218
  %v236 = vsub.f32 %v180, %v219
  %v237 = vsub.f32 %v182, %v219
  %v238 = vmul.f32 %v220, %v220
  %v239 = vmul.f32 %v221, %v221
  %v240 = vmul.f32 %v222, %v222
  %v241 = vmul.f32 %v223, %v223
  %v242 = vmul.f32 %v224, %v224
  %v243 = vmul.f32 %v225, %v225
  %v244 = vmul.f32 %v226, %v226
  %v245 = vmul.f32 %v227, %v227
  %v246 = vmul.f32 %v228, %v228
  %v247 = vmul.f32 %v229, %v229
  %v248 = vmul.f32 %v230, %v230
  %v249 = vmul.f32 %v231, %v231
  %v250 = vmul.f32 %v232, %v232
  %v251 = vmul.f32 %v233, %v233
  %v252 = vmul.f32 %v234, %v234
  %v253 = vmul.f32 %v235, %v235
  %v254 = vmul.f32 %v236, %v236
  %v255 = vmul.f32 %v237, %v237
  %v256 = vadd.f32 %v238, %v239
  %257 = vadd.xlane.f32.xlu0 %v256
  %v258 = vpop.xlane.xlu0 %257
  %v259 = vadd.f32 %v240, %v241
  %260 = vadd.xlane.f32.xlu0 %v259
  %v261 = vpop.xlane.xlu0 %260
  %v262 = vadd.f32 %v242, %v243
  %263 = vadd.xlane.f32.xlu0 %v262
  %v264 = vpop.xlane.xlu0 %263
  %v265 = vadd.f32 %v244, %v245
  %266 = vadd.xlane.f32.xlu0 %v265
  %v267 = vpop.xlane.xlu0 %266
  %v268 = vadd.f32 %v246, %v247
  %269 = vadd.xlane.f32.xlu0 %v268
  %v270 = vpop.xlane.xlu0 %269
  %v271 = vadd.f32 %v248, %v249
  %272 = vadd.xlane.f32.xlu0 %v271
  %v273 = vpop.xlane.xlu0 %272
  %v274 = vadd.f32 %v250, %v251
  %275 = vadd.xlane.f32.xlu0 %v274
  %v276 = vpop.xlane.xlu0 %275
  %v277 = vadd.f32 %v252, %v253
  %278 = vadd.xlane.f32.xlu0 %v277
  %v279 = vpop.xlane.xlu0 %278
  %v280 = vadd.f32 %v254, %v255
  %281 = vadd.xlane.f32.xlu0 %v280
  %v282 = vpop.xlane.xlu0 %281
  %v283 = vmul.f32 %v258, 0.00390625
  %v284 = vmul.f32 %v261, 0.00390625
  %v285 = vmul.f32 %v264, 0.00390625
  %v286 = vmul.f32 %v267, 0.00390625
  %v287 = vmul.f32 %v270, 0.00390625
  %v288 = vmul.f32 %v273, 0.00390625
  %v289 = vmul.f32 %v276, 0.00390625
  %v290 = vmul.f32 %v279, 0.00390625
  %v291 = vmul.f32 %v282, 0.00390625
  %v292 = vld [vmem:[%s2] sm:$0xff]
  %v293 = vld [vmem:[%s2 + $0x8] sm:$0xff]
  %v294 = vld [vmem:[%s2 + $0x10] sm:$0xff]
  %v295 = vld [vmem:[%s2 + $0x18] sm:$0xff]
  %v296 = vld [vmem:[%s2 + $0x20] sm:$0xff]
  %v297 = vld [vmem:[%s2 + $0x28] sm:$0xff]
  %v298 = vld [vmem:[%s2 + $0x30] sm:$0xff]
  %v299 = vld [vmem:[%s2 + $0x38] sm:$0xff]
  %v300 = vld [vmem:[%s2 + $0x40] sm:$0xff]
  %v301 = vadd.f32 %v283, 1e-05
  %v302 = vadd.f32 %v284, 1e-05
  %v303 = vadd.f32 %v285, 1e-05
  %v304 = vadd.f32 %v286, 1e-05
  %v305 = vadd.f32 %v287, 1e-05
  %v306 = vadd.f32 %v288, 1e-05
  %v307 = vadd.f32 %v289, 1e-05
  %v308 = vadd.f32 %v290, 1e-05
  %v309 = vadd.f32 %v291, 1e-05
  %v310 = vrsqrt.pop %v301
  %v311 = vrsqrt.pop %v302
  %v312 = vrsqrt.pop %v303
  %v313 = vrsqrt.pop %v304
  %v314 = vrsqrt.pop %v305
  %v315 = vrsqrt.pop %v306
  %v316 = vrsqrt.pop %v307
  %v317 = vrsqrt.pop %v308
  %v318 = vrsqrt.pop %v309
  %v319 = vmul.f32 %v292, %v310
  %v320 = vmul.f32 %v293, %v311
  %v321 = vmul.f32 %v294, %v312
  %v322 = vmul.f32 %v295, %v313
  %v323 = vmul.f32 %v296, %v314
  %v324 = vmul.f32 %v297, %v315
  %v325 = vmul.f32 %v298, %v316
  %v326 = vmul.f32 %v299, %v317
  %v327 = vmul.f32 %v300, %v318
  %329 = vset.pattern.permute.xlu0 0
  %330 = vperm.xlu0 %329, %v319
  %v331 = vpop.permute.xlu0 %330
  %334 = vset.pattern.permute.xlu0 0
  %335 = vperm.xlu0 %334, %v320
  %v336 = vpop.permute.xlu0 %335
  %339 = vset.pattern.permute.xlu0 0
  %340 = vperm.xlu0 %339, %v321
  %v341 = vpop.permute.xlu0 %340
  %344 = vset.pattern.permute.xlu0 0
  %345 = vperm.xlu0 %344, %v322
  %v346 = vpop.permute.xlu0 %345
  %349 = vset.pattern.permute.xlu0 0
  %350 = vperm.xlu0 %349, %v323
  %v351 = vpop.permute.xlu0 %350
  %354 = vset.pattern.permute.xlu0 0
  %355 = vperm.xlu0 %354, %v324
  %v356 = vpop.permute.xlu0 %355
  %359 = vset.pattern.permute.xlu0 0
  %360 = vperm.xlu0 %359, %v325
  %v361 = vpop.permute.xlu0 %360
  %364 = vset.pattern.permute.xlu0 0
  %365 = vperm.xlu0 %364, %v326
  %v366 = vpop.permute.xlu0 %365
  %369 = vset.pattern.permute.xlu0 0
  %370 = vperm.xlu0 %369, %v327
  %v371 = vpop.permute.xlu0 %370
  %v373 = vmul.f32 %v220, %v331
  %v374 = vmul.f32 %v221, %v331
  %v375 = vmul.f32 %v222, %v336
  %v376 = vmul.f32 %v223, %v336
  %v377 = vmul.f32 %v224, %v341
  %v378 = vmul.f32 %v225, %v341
  %v379 = vmul.f32 %v226, %v346
  %v380 = vmul.f32 %v227, %v346
  %v381 = vmul.f32 %v228, %v351
  %v382 = vmul.f32 %v229, %v351
  %v383 = vmul.f32 %v230, %v356
  %v384 = vmul.f32 %v231, %v356
  %v385 = vmul.f32 %v232, %v361
  %v386 = vmul.f32 %v233, %v361
  %v387 = vmul.f32 %v234, %v366
  %v388 = vmul.f32 %v235, %v366
  %v389 = vmul.f32 %v236, %v371
  %v390 = vmul.f32 %v237, %v371
  %v391 = vld [vmem:[%s3] sm:$0xff]
  %v392 = vld [vmem:[%s3 + $0x8] sm:$0xff]
  %v393 = vld [vmem:[%s3 + $0x10] sm:$0xff]
  %v394 = vld [vmem:[%s3 + $0x18] sm:$0xff]
  %v395 = vld [vmem:[%s3 + $0x20] sm:$0xff]
  %v396 = vld [vmem:[%s3 + $0x28] sm:$0xff]
  %v397 = vld [vmem:[%s3 + $0x30] sm:$0xff]
  %v398 = vld [vmem:[%s3 + $0x38] sm:$0xff]
  %v399 = vld [vmem:[%s3 + $0x40] sm:$0xff]
  %401 = vset.pattern.permute.xlu0 0
  %402 = vperm.xlu0 %401, %v391
  %v403 = vpop.permute.xlu0 %402
  %406 = vset.pattern.permute.xlu0 0
  %407 = vperm.xlu0 %406, %v392
  %v408 = vpop.permute.xlu0 %407
  %411 = vset.pattern.permute.xlu0 0
  %412 = vperm.xlu0 %411, %v393
  %v413 = vpop.permute.xlu0 %412
  %416 = vset.pattern.permute.xlu0 0
  %417 = vperm.xlu0 %416, %v394
  %v418 = vpop.permute.xlu0 %417
  %421 = vset.pattern.permute.xlu0 0
  %422 = vperm.xlu0 %421, %v395
  %v423 = vpop.permute.xlu0 %422
  %426 = vset.pattern.permute.xlu0 0
  %427 = vperm.xlu0 %426, %v396
  %v428 = vpop.permute.xlu0 %427
  %431 = vset.pattern.permute.xlu0 0
  %432 = vperm.xlu0 %431, %v397
  %v433 = vpop.permute.xlu0 %432
  %436 = vset.pattern.permute.xlu0 0
  %437 = vperm.xlu0 %436, %v398
  %v438 = vpop.permute.xlu0 %437
  %441 = vset.pattern.permute.xlu0 0
  %442 = vperm.xlu0 %441, %v399
  %v443 = vpop.permute.xlu0 %442
  %v445 = vadd.f32 %v373, %v403
  %v446 = vadd.f32 %v374, %v403
  %v447 = vadd.f32 %v375, %v408
  %v448 = vadd.f32 %v376, %v408
  %v449 = vadd.f32 %v377, %v413
  %v450 = vadd.f32 %v378, %v413
  %v451 = vadd.f32 %v379, %v418
  %v452 = vadd.f32 %v380, %v418
  %v453 = vadd.f32 %v381, %v423
  %v454 = vadd.f32 %v382, %v423
  %v455 = vadd.f32 %v383, %v428
  %v456 = vadd.f32 %v384, %v428
  %v457 = vadd.f32 %v385, %v433
  %v458 = vadd.f32 %v386, %v433
  %v459 = vadd.f32 %v387, %v438
  %v460 = vadd.f32 %v388, %v438
  %v461 = vadd.f32 %v389, %v443
  %v462 = vadd.f32 %v390, %v443
  %v463 = vld [vmem:[%s4] sm:$0xff]
  %v464 = vld [vmem:[%s4 + $0x8] sm:$0xff]
  %v465 = vld [vmem:[%s4 + $0x10] sm:$0xff]
  %v466 = vld [vmem:[%s4 + $0x18] sm:$0xff]
  %v467 = vld [vmem:[%s4 + $0x20] sm:$0xff]
  %v468 = vld [vmem:[%s4 + $0x28] sm:$0xff]
  %v469 = vld [vmem:[%s4 + $0x30] sm:$0xff]
  %v470 = vld [vmem:[%s4 + $0x38] sm:$0xff]
  %v471 = vld [vmem:[%s4 + $0x40] sm:$0xff]
  %v472 = vld [vmem:[%s4 + $0x48] sm:$0xff]
  %v473 = vld [vmem:[%s4 + $0x50] sm:$0xff]
  %v474 = vld [vmem:[%s4 + $0x58] sm:$0xff]
  %v475 = vld [vmem:[%s4 + $0x60] sm:$0xff]
  %v476 = vld [vmem:[%s4 + $0x68] sm:$0xff]
  %v477 = vld [vmem:[%s4 + $0x70] sm:$0xff]
  %v478 = vld [vmem:[%s4 + $0x78] sm:$0xff]
  %v479 = vld [vmem:[%s4 + $0x80] sm:$0xff]
  %v480 = vld [vmem:[%s4 + $0x88] sm:$0xff]
  %v481 = vadd.f32 %v445, %v463
  %v482 = vadd.f32 %v446, %v464
  %v483 = vadd.f32 %v447, %v465
  %v484 = vadd.f32 %v448, %v466
  %v485 = vadd.f32 %v449, %v467
  %v486 = vadd.f32 %v450, %v468
  %v487 = vadd.f32 %v451, %v469
  %v488 = vadd.f32 %v452, %v470
  %v489 = vadd.f32 %v453, %v471
  %v490 = vadd.f32 %v454, %v472
  %v491 = vadd.f32 %v455, %v473
  %v492 = vadd.f32 %v456, %v474
  %v493 = vadd.f32 %v457, %v475
  %v494 = vadd.f32 %v458, %v476
  %v495 = vadd.f32 %v459, %v477
  %v496 = vadd.f32 %v460, %v478
  %v497 = vadd.f32 %v461, %v479
  %v498 = vadd.f32 %v462, %v480
  %499 = vst [vmem:[%s5] sm:$0xff] %v481
  %500 = vst [vmem:[%s5 + $0x8] sm:$0xff] %v482
  %501 = vst [vmem:[%s5 + $0x10] sm:$0xff] %v483
  %502 = vst [vmem:[%s5 + $0x18] sm:$0xff] %v484
  %503 = vst [vmem:[%s5 + $0x20] sm:$0xff] %v485
  %504 = vst [vmem:[%s5 + $0x28] sm:$0xff] %v486
  %505 = vst [vmem:[%s5 + $0x30] sm:$0xff] %v487
  %506 = vst [vmem:[%s5 + $0x38] sm:$0xff] %v488
  %507 = vst [vmem:[%s5 + $0x40] sm:$0xff] %v489
  %508 = vst [vmem:[%s5 + $0x48] sm:$0xff] %v490
  %509 = vst [vmem:[%s5 + $0x50] sm:$0xff] %v491
  %510 = vst [vmem:[%s5 + $0x58] sm:$0xff] %v492
  %511 = vst [vmem:[%s5 + $0x60] sm:$0xff] %v493
  %512 = vst [vmem:[%s5 + $0x68] sm:$0xff] %v494
  %513 = vst [vmem:[%s5 + $0x70] sm:$0xff] %v495
  %514 = vst [vmem:[%s5 + $0x78] sm:$0xff] %v496
  %515 = vst [vmem:[%s5 + $0x80] sm:$0xff] %v497
  %516 = vst [vmem:[%s5 + $0x88] sm:$0xff] %v498
  // Predicated region
  $region22: #{conv_bn_add.1} parent=0 // pred_check
    _
  $region23: #{conv_bn_add.1} parent=0 // pred_check_branch
    %518 = sbr.rel (0) target = $region25
  $region24: #{conv_bn_add.1} parent=0 // pred_region
    _
  $region25: #{conv_bn_add.1} parent=0 // pred_fallthru
    _
  // Predicated region
  $region26: #{conv_bn_add.1} parent=0 // pred_check
    _
  $region27: #{conv_bn_add.1} parent=0 // pred_check_branch
    %520 = sbr.rel (0) target = $region29
  $region28: #{conv_bn_add.1} parent=0 // pred_region
    _
  $region29: #{conv_bn_add.1} parent=0 // pred_fallthru
    _

</llo_original>
